<compile_context>
chip_gen: v7x
topology: tpu7x:2x2x1
jax: 0.10.0
libtpu: 0.0.40
codegen_flags: <defaults>
</compile_context>

<pallas_src>
import jax
import jax.numpy as jnp
import numpy as np
from jax.experimental import pallas as pl
from jax.experimental.pallas import tpu as pltpu


# ----------------------------------------------------------------------------
# Parameter / buffer construction (plain JAX glue, mirrors nn.Module.__init__)
# ----------------------------------------------------------------------------
def make_rope_tables(d_model, max_len=2048, base=10000, cls_token=False):
    assert d_model % 2 == 0
    inv_freq = 1.0 / (
        base ** (jnp.arange(0, d_model, 2, dtype=jnp.float32) / d_model)
    )
    pos = jnp.arange(max_len, dtype=jnp.float32)[:, None] * 0.25  # pos *= 1/4
    freqs = pos * inv_freq[None, :]                      # (max_len, D/2)
    pe = jnp.concatenate([freqs, freqs], axis=-1)        # (max_len, D)
    pe_sin = jnp.sin(pe)
    pe_cos = jnp.cos(pe)
    if cls_token:
        zeros = jnp.zeros((1, d_model), jnp.float32)
        pe_sin = jnp.concatenate([zeros, pe_sin], axis=0)
        pe_cos = jnp.concatenate([zeros, pe_cos], axis=0)
    return pe_sin, pe_cos


def prepare_cos_sin(pe_sin, pe_cos, seq_len, dtype):
    """Hoistable / cacheable table prep (once per (seq_len, dtype), not per call):
    slice to seq_len, fold the even-lane negation of the interleaved rotation
    into sin, cast to the activation dtype, pack {cos, sin} into one operand."""
    D = pe_sin.shape[-1]
    assert pe_sin.shape[0] >= seq_len and pe_cos.shape[0] >= seq_len, \
        "seq_len exceeds max_len of the rotary tables"
    sign = jnp.where((jnp.arange(D) % 2) == 0, -1.0, 1.0).astype(pe_sin.dtype)
    cos_sin = jnp.stack([pe_cos[:seq_len], pe_sin[:seq_len] * sign], axis=0)
    return cos_sin.astype(dtype)                          # (2, S, D)


# ----------------------------------------------------------------------------
# Kernel body:  out = x * cos + rotate_interleaved(x) * sin
#   rotate_interleaved(x)[..., 2i]   = -x[..., 2i+1]
#   rotate_interleaved(x)[..., 2i+1] =  x[..., 2i]
# The even-lane minus sign is pre-folded into the sin table in the wrapper, so
# the body is two XLU rolls + one parity select + two FMAs.  The same body
# works for both the native (…, S, D) layout and the lane-dense folded
# (…, S*D/128, 128) layout because D is even (pairs never straddle a fold
# boundary, and roll wrap-around lanes are discarded by the parity select).
# ----------------------------------------------------------------------------
def rope_kernel(x_ref, cs_ref, o_ref):
    x = x_ref[...]                 # (bB, bR, L)
    cos = cs_ref[0]                # (bR, L)
    sin_signed = cs_ref[1]         # (bR, L), even lanes already negated
    d = x.shape[-1]
    lane_axis = x.ndim - 1

    lane = jax.lax.broadcasted_iota(jnp.int32, (1, 1, d), dimension=2)
    is_even = (lane % 2) == 0

    # roll(x, 1)[j]   == x[j-1]  -> neighbour needed at odd lanes
    # roll(x, d-1)[j] == x[j+1]  -> neighbour needed at even lanes
    rot_fwd = pltpu.roll(x, shift=1, axis=lane_axis)
    rot_bwd = pltpu.roll(x, shift=d - 1, axis=lane_axis)
    x2 = jnp.where(is_even, rot_bwd, rot_fwd)

    o_ref[...] = (x * cos[None] + x2 * sin_signed[None]).astype(o_ref.dtype)


# ----------------------------------------------------------------------------
# Tiling heuristics
# ----------------------------------------------------------------------------
_TARGET_BLOCK_BYTES = 4 << 20   # ~4 MiB of x per grid step
_MEGACORE_MIN_BYTES = 2 << 20   # below this, a single-step grid is acceptable


def _sublane_align(itemsize):
    return {4: 8, 2: 16, 1: 32}.get(int(itemsize), 8)


def _largest_divisor_at_most(n, cap):
    cap = int(max(1, min(n, cap)))
    for c in range(cap, 0, -1):
        if n % c == 0:
            return c
    return 1


def _pick_row_tile(n_rows, row_bytes, align, target_bytes):
    """Largest divisor of n_rows <= target rows that is a multiple of `align`
    (falling back to multiples of 8, then the full extent)."""
    target_rows = max(1, target_bytes // max(1, row_bytes))
    cap = int(min(n_rows, target_rows))
    for step in (align, 8):
        c = cap - (cap % step)
        while c >= step:
            if n_rows % c == 0:
                return c
            c -= step
    return n_rows


def _pick_blocks(B, n_rows, row_bytes, align, target_bytes):
    rows_blk = _pick_row_tile(n_rows, row_bytes, align, target_bytes)
    if rows_blk == n_rows:
        # Whole row extent fits in one tile: fold batch rows into the block.
        b_blk = _largest_divisor_at_most(
            B, max(1, target_bytes // max(1, n_rows * row_bytes)))
    else:
        b_blk = 1
    return b_blk, rows_blk


def _ensure_two_steps(B, n_rows, b_blk, rows_blk, align, total_bytes):
    """v7x has 2 TensorCores: make sure the grid exposes >=2 blocks along a
    parallel axis on non-trivial inputs (also re-enables pipelining)."""
    steps = (n_rows // rows_blk) * (B // b_blk)
    if steps >= 2 or total_bytes <= _MEGACORE_MIN_BYTES:
        return b_blk, rows_blk
    if B >= 2:
        return _largest_divisor_at_most(B, B // 2), rows_blk
    for step in (align, 8):
        c = (n_rows // 2) - ((n_rows // 2) % step)
        while c >= step:
            if n_rows % c == 0:
                return b_blk, c
            c -= step
    return b_blk, rows_blk


def _vmem_ceiling_bytes():
    """Generation-aware VMEM ceiling: leave ~16 MiB of headroom under the
    physical capacity (64 MiB on v7x, 128 MiB on v5e/v6e), never exceed 96 MiB."""
    cap = 64 << 20
    try:
        cap = int(getattr(pltpu.get_tpu_info(), "vmem_capacity_bytes", cap))
    except Exception:
        pass
    return int(max(16 << 20, min(cap - (16 << 20), 96 << 20)))


# ----------------------------------------------------------------------------
# Wrapper
# ----------------------------------------------------------------------------
def rope_embedding_1d(x, pe_sin, pe_cos, *, cos_sin=None, block_s=None,
                      block_b=None, donate_x=False):
    """Apply 1D RoPE (matching the PyTorch module forward) to x of (B, S, D)."""
    B, S, D = x.shape
    assert D % 2 == 0
    assert S <= pe_sin.shape[0] and S <= pe_cos.shape[0], \
        "seq_len exceeds max_len of the rotary tables"
    itemsize = jnp.dtype(x.dtype).itemsize
    align = _sublane_align(itemsize)

    # ---- table prep (hoistable; pass precomputed `cos_sin` to skip) ----------
    if cos_sin is None:
        cos_sin = prepare_cos_sin(pe_sin, pe_cos, S, x.dtype)
    else:
        assert cos_sin.shape == (2, S, D) and cos_sin.dtype == x.dtype

    # ---- lane-dense fold ------------------------------------------------------
    fold = (D % 128 != 0) and ((S * D) % 128 == 0)
    if fold:
        n_rows, last = (S * D) // 128, 128
        x_op = x.reshape(B, n_rows, last)
        cs_op = cos_sin.reshape(2, n_rows, last)
    else:
        # TODO(synk): if S*D is not a multiple of 128 and D < 128, the output
        # stores stay masked (vst.msk); pad S upstream to recover full lanes.
        n_rows, last = S, D
        x_op, cs_op = x, cos_sin

    row_bytes = last * itemsize
    total_bytes = B * n_rows * row_bytes

    # ---- tiling ---------------------------------------------------------------
    if block_s is None:
        b_blk, rows_blk = _pick_blocks(B, n_rows, row_bytes, align,
                                       _TARGET_BLOCK_BYTES)
        if block_b is not None:
            b_blk = block_b
        else:
            b_blk, rows_blk = _ensure_two_steps(B, n_rows, b_blk, rows_blk,
                                                align, total_bytes)
    else:
        assert S % block_s == 0
        if fold:
            assert (block_s * D) % 128 == 0, \
                "with the lane-dense fold, block_s*D must be a multiple of 128"
            rows_blk = (block_s * D) // 128
        else:
            rows_blk = block_s
        assert rows_blk == n_rows or rows_blk % 8 == 0, \
            "seq tile must map to a multiple of 8 rows (or the full extent)"
        b_blk = 1 if block_b is None else block_b
    assert B % b_blk == 0 and n_rows % rows_blk == 0

    # Grid: row tiles outermost (shardable across v7x's two TensorCores), batch
    # innermost so the table block index is constant across consecutive steps
    # and its DMA is skipped after the first batch of each row tile.
    grid = (n_rows // rows_blk, B // b_blk)

    # ---- explicit, generation-aware VMEM budget --------------------------------
    x_blk_bytes = b_blk * rows_blk * row_bytes
    tbl_blk_bytes = 2 * rows_blk * row_bytes
    per_step = 2 * x_blk_bytes + tbl_blk_bytes            # x + out + packed table
    vmem_limit = int(min(_vmem_ceiling_bytes(),
                         max(16 << 20, 2 * per_step + (2 << 20))))

    kwargs = {}
    if donate_x:
        # Caller guarantees x is dead after this op: reuse its HBM buffer.
        kwargs["input_output_aliases"] = {0: 0}

    out = pl.pallas_call(
        rope_kernel,
        out_shape=jax.ShapeDtypeStruct((B, n_rows, last), x.dtype),
        grid_spec=pltpu.PrefetchScalarGridSpec(
            num_scalar_prefetch=0,
            grid=grid,
            in_specs=[
                pl.BlockSpec((b_blk, rows_blk, last), lambda r, b: (b, r, 0)),
                pl.BlockSpec((2, rows_blk, last), lambda r, b: (0, r, 0)),
            ],
            out_specs=pl.BlockSpec((b_blk, rows_blk, last),
                                   lambda r, b: (b, r, 0)),
        ),
        compiler_params=pltpu.CompilerParams(
            dimension_semantics=("parallel", "parallel"),
            vmem_limit_bytes=vmem_limit,
        ),
        **kwargs,
    )(x_op, cs_op)

    return out.reshape(B, S, D) if fold else out


# ----------------------------------------------------------------------------
# Pure-JAX reference (mirrors the PyTorch forward exactly)
# ----------------------------------------------------------------------------
def rope_ref(x, pe_sin, pe_cos):
    S = x.shape[1]
    x2 = jnp.stack([-x[..., 1::2], x[..., ::2]], axis=-1).reshape(x.shape)
    return x * pe_cos[:S] + x2 * pe_sin[:S]


if __name__ == "__main__":
    D = 32
    max_len = 64
    pe_sin, pe_cos = make_rope_tables(D, max_len=max_len, base=10000,
                                      cls_token=False)
    key = jax.random.PRNGKey(0)

    # 1) Small shape, auto tiling (lane-dense fold, grid (1,1)).
    B, S = 2, 16
    x = jax.random.normal(key, (B, S, D), dtype=jnp.float32)
    ref = rope_ref(x, pe_sin, pe_cos)
    out = jax.block_until_ready(rope_embedding_1d(x, pe_sin, pe_cos))
    np.testing.assert_allclose(np.asarray(out), np.asarray(ref),
                               rtol=1e-5, atol=1e-5)

    # 2) Longer sequence, explicit seq tiling + precomputed (hoisted) tables:
    #    fold -> rows_blk = 8, grid (2, 2); exercises the pipelined multi-step
    #    path and table-DMA reuse across batch-inner steps.
    S2 = 64
    x2 = jax.random.normal(jax.random.fold_in(key, 1), (B, S2, D),
                           dtype=jnp.float32)
    cs2 = prepare_cos_sin(pe_sin, pe_cos, S2, jnp.float32)
    ref2 = rope_ref(x2, pe_sin, pe_cos)
    out2 = jax.block_until_ready(
        rope_embedding_1d(x2, pe_sin, pe_cos, cos_sin=cs2, block_s=32,
                          block_b=1))
    np.testing.assert_allclose(np.asarray(out2), np.asarray(ref2),
                               rtol=1e-5, atol=1e-5)

    # 3) bf16 activations (tables cast to bf16, 16-row sublane alignment).
    xb = x2.astype(jnp.bfloat16)
    outb = jax.block_until_ready(rope_embedding_1d(xb, pe_sin, pe_cos))
    refb = rope_ref(xb, pe_sin.astype(jnp.bfloat16),
                    pe_cos.astype(jnp.bfloat16))
    np.testing.assert_allclose(np.asarray(outb.astype(jnp.float32)),
                               np.asarray(refb.astype(jnp.float32)),
                               rtol=2e-2, atol=2e-2)

    # 4) Native (unfolded) fallback: S*D not a multiple of 128.
    S3 = 3
    x3 = jax.random.normal(jax.random.fold_in(key, 2), (B, S3, D),
                           dtype=jnp.float32)
    ref3 = rope_ref(x3, pe_sin, pe_cos)
    out3 = jax.block_until_ready(rope_embedding_1d(x3, pe_sin, pe_cos))
    np.testing.assert_allclose(np.asarray(out3), np.asarray(ref3),
                               rtol=1e-5, atol=1e-5)

    print("KERNEL_OK")
</pallas_src>

<mosaic_0001>
module attributes {stable_mosaic.version = 11 : i64} {
  func.func @rope_kernel(%arg0: i32, %arg1: i32, %arg2: memref<2x4x128xf32, #tpu.memory_space<vmem>>, %arg3: memref<2x4x128xf32, #tpu.memory_space<vmem>>, %arg4: memref<2x4x128xf32, #tpu.memory_space<vmem>>) attributes {dimension_semantics = [#tpu.dimension_semantics<parallel>, #tpu.dimension_semantics<parallel>], iteration_bounds = array<i64: 1, 1>, scalar_prefetch = 0 : i64, scratch_operands = 0 : i64, tpu.core_type = #tpu.core_type<tc>, window_params = [{transform_indices = @transform_0, window_bounds = array<i64: 2, 4, 128>}, {transform_indices = @transform_1, window_bounds = array<i64: 2, 4, 128>}, {transform_indices = @transform_2, window_bounds = array<i64: 2, 4, 128>}]} {
    %c0 = arith.constant 0 : index
    %c0_0 = arith.constant 0 : index
    %c0_1 = arith.constant 0 : index
    %0 = vector.load %arg2[%c0, %c0_0, %c0_1] : memref<2x4x128xf32, #tpu.memory_space<vmem>>, vector<2x4x128xf32>
    %c0_2 = arith.constant 0 : index
    %c0_3 = arith.constant 0 : index
    %c0_4 = arith.constant 0 : index
    %1 = vector.load %arg3[%c0_2, %c0_3, %c0_4] : memref<2x4x128xf32, #tpu.memory_space<vmem>>, vector<1x4x128xf32>
    %2 = vector.shape_cast %1 : vector<1x4x128xf32> to vector<4x128xf32>
    %c1 = arith.constant 1 : index
    %c0_5 = arith.constant 0 : index
    %c0_6 = arith.constant 0 : index
    %3 = vector.load %arg3[%c1, %c0_5, %c0_6] : memref<2x4x128xf32, #tpu.memory_space<vmem>>, vector<1x4x128xf32>
    %4 = vector.shape_cast %3 : vector<1x4x128xf32> to vector<4x128xf32>
    %5 = tpu.iota {dimensions = array<i32: 2>} : vector<1x1x128xi32>
    %c2_i32 = arith.constant 2 : i32
    %c0_i32 = arith.constant 0 : i32
    %6 = arith.cmpi eq, %c2_i32, %c0_i32 : i32
    %c1_i32 = arith.constant 1 : i32
    %7 = arith.select %6, %c1_i32, %c2_i32 : i32
    %8 = vector.broadcast %7 : i32 to vector<1x1x128xi32>
    %9 = arith.remsi %5, %8 : vector<1x1x128xi32>
    %c0_i32_7 = arith.constant 0 : i32
    %10 = vector.broadcast %c0_i32_7 : i32 to vector<1x1x128xi32>
    %11 = arith.cmpi ne, %9, %10 : vector<1x1x128xi32>
    %c0_i32_8 = arith.constant 0 : i32
    %12 = vector.broadcast %c0_i32_8 : i32 to vector<1x1x128xi32>
    %13 = arith.cmpi slt, %9, %12 : vector<1x1x128xi32>
    %c0_i32_9 = arith.constant 0 : i32
    %14 = arith.cmpi slt, %7, %c0_i32_9 : i32
    %15 = vector.broadcast %14 : i1 to vector<1x1x128xi1>
    %16 = vector.broadcast %15 : vector<1x1x128xi1> to vector<1x1x128xi1>
    %17 = arith.xori %13, %16 : vector<1x1x128xi1>
    %18 = arith.andi %17, %11 : vector<1x1x128xi1>
    %19 = vector.broadcast %7 : i32 to vector<1x1x128xi32>
    %20 = arith.addi %9, %19 : vector<1x1x128xi32>
    %21 = arith.select %18, %20, %9 : vector<1x1x128xi1>, vector<1x1x128xi32>
    %c0_i32_10 = arith.constant 0 : i32
    %22 = vector.broadcast %c0_i32_10 : i32 to vector<1x1x128xi32>
    %23 = arith.cmpi eq, %21, %22 : vector<1x1x128xi32>
    %c1_i32_11 = arith.constant 1 : i32
    %24 = tpu.dynamic_rotate %0 by %c1_i32_11 dim 2 : vector<2x4x128xf32>, i32 -> vector<2x4x128xf32>
    %c127_i32 = arith.constant 127 : i32
    %25 = tpu.dynamic_rotate %0 by %c127_i32 dim 2 : vector<2x4x128xf32>, i32 -> vector<2x4x128xf32>
    %26 = vector.shape_cast %23 : vector<1x1x128xi1> to vector<1x1x128xi1>
    %27 = vector.broadcast %26 : vector<1x1x128xi1> to vector<2x4x128xi1>
    %28 = arith.select %27, %25, %24 : vector<2x4x128xi1>, vector<2x4x128xf32>
    %29 = vector.shape_cast %2 : vector<4x128xf32> to vector<1x4x128xf32>
    %30 = vector.broadcast %29 : vector<1x4x128xf32> to vector<2x4x128xf32>
    %31 = arith.mulf %0, %30 : vector<2x4x128xf32>
    %32 = vector.shape_cast %4 : vector<4x128xf32> to vector<1x4x128xf32>
    %33 = vector.broadcast %32 : vector<1x4x128xf32> to vector<2x4x128xf32>
    %34 = arith.mulf %28, %33 : vector<2x4x128xf32>
    %35 = arith.addf %31, %34 : vector<2x4x128xf32>
    %c0_12 = arith.constant 0 : index
    %c0_13 = arith.constant 0 : index
    %c0_14 = arith.constant 0 : index
    %36 = vector.load %arg4[%c0_12, %c0_13, %c0_14] : memref<2x4x128xf32, #tpu.memory_space<vmem>>, vector<2x4x128xf32>
    tpu.vector_store %arg4[%c0_12, %c0_13, %c0_14], %35 {strides = array<i32>} : memref<2x4x128xf32, #tpu.memory_space<vmem>>, vector<2x4x128xf32>,
    return
  }
  func.func @transform_0(%arg0: i32, %arg1: i32) -> (i32, i32, i32) {
    %c0_i32 = arith.constant 0 : i32
    %c0_i32_0 = arith.constant 0 : i32
    return %arg1, %arg0, %c0_i32 : i32, i32, i32
  }
  func.func @transform_1(%arg0: i32, %arg1: i32) -> (i32, i32, i32) {
    %c0_i32 = arith.constant 0 : i32
    %c0_i32_0 = arith.constant 0 : i32
    %c0_i32_1 = arith.constant 0 : i32
    return %c0_i32, %arg0, %c0_i32_0 : i32, i32, i32
  }
  func.func @transform_2(%arg0: i32, %arg1: i32) -> (i32, i32, i32) {
    %c0_i32 = arith.constant 0 : i32
    %c0_i32_0 = arith.constant 0 : i32
    return %arg1, %arg0, %c0_i32 : i32, i32, i32
  }
}

</mosaic_0001>

<llo_original>
// kernel: tpu_custom_call.1
$region0: #{tpu_custom_call.1}
  #allocation0 [shape = 'u32[]', space=smem, size = 0x4, offset = 0x4, fixed_abs, tag = 'smem constant byte address 0x4 - core index']
  #allocation1 [shape = 'u32[144,128]{1,0:T(1,128)}', space=vmem, size = 0x12000, scoped, tag = 'internal scratch']
  %s0 = inlined_call_operand.hbm [shape: f32[2,4,128], index: 0, kind: input, shape index: {}]
  %s1 = inlined_call_operand.hbm [shape: f32[2,4,128], index: 1, kind: input, shape index: {}]
  %s2 = inlined_call_operand.hbm [shape: f32[2,4,128], index: 2, kind: output, shape index: {}]
  %s3 = sld [smem:[#allocation0]]
  $region26: #{tpu_custom_call.1} parent=0
    _
  %s5 = ssub.s32 1, %s3
  %s6 = scalar_select 0, %s5, %s3
  $region1: #{tpu_custom_call.1} parent=0
    #allocation2 [shape = 'u8[4096]{0}', space=vmem, size = 0x1000, scoped, tag = 'input window, operand 0, single buffered']
    #allocation3 [shape = 's32[1]{0}', space=sflag, size = 0x4, scoped, tag = 'scoped memory for tpu_custom_call.1']
    #allocation4 [shape = 's32[1]{0}', space=sflag, size = 0x4, scoped, tag = 'scoped memory for tpu_custom_call.1']
    #allocation5 [shape = 'u8[4096]{0}', space=vmem, size = 0x1000, scoped, tag = 'input window, operand 1, single buffered']
    #allocation6 [shape = 's32[1]{0}', space=sflag, size = 0x4, scoped, tag = 'scoped memory for tpu_custom_call.1']
    #allocation7 [shape = 'u8[4096]{0}', space=vmem, size = 0x1000, scoped, tag = 'output window, operand 0, single buffered']
    %7 = vsyncpa [#allocation3], 0
    %8 = vsyncpa [#allocation6], 0
    %9 = vsyncpa [#allocation4], 0
    // Predicated region
    $region2: #{tpu_custom_call.1} parent=1 // pred_check
      _
    $region3: #{tpu_custom_call.1} parent=1 // pred_check_branch
      %11 = sbr.rel (0) target = $region5
    $region4: #{tpu_custom_call.1} parent=1 // pred_region
      %s13 = ssub.s32 128, 128
      %14 = vsyncadd [#allocation3], %s13
      %s15 = sshll.u32 [#allocation2], 4
      %s16 = int_to_ptr.vmem [resolvable:$true] %s15
      %21 = dma.hbm_to_vmem [thread:$0]  %s0, 128, %s16, [#allocation3], 64, 64, 4
    $region5: #{tpu_custom_call.1} parent=1 // pred_fallthru
      _
    // Predicated region
    $region6: #{tpu_custom_call.1} parent=1 // pred_check
      _
    $region7: #{tpu_custom_call.1} parent=1 // pred_check_branch
      %23 = sbr.rel (0) target = $region9
    $region8: #{tpu_custom_call.1} parent=1 // pred_region
      %s25 = ssub.s32 128, 128
      %26 = vsyncadd [#allocation6], %s25
      %s27 = sshll.u32 [#allocation5], 4
      %s28 = int_to_ptr.vmem [resolvable:$true] %s27
      %33 = dma.hbm_to_vmem [thread:$0]  %s1, 128, %s28, [#allocation6], 64, 64, 4
    $region9: #{tpu_custom_call.1} parent=1 // pred_fallthru
      _
    // Predicated region
    $region10: #{tpu_custom_call.1} parent=1 // pred_check
      _
    $region11: #{tpu_custom_call.1} parent=1 // pred_check_branch
      %35 = sbr.rel (0) target = $region13
    $region12: #{tpu_custom_call.1} parent=1 // pred_region
      %36 = dma.done [#allocation3], 128
    $region13: #{tpu_custom_call.1} parent=1 // pred_fallthru
      _
    // Predicated region
    $region14: #{tpu_custom_call.1} parent=1 // pred_check
      _
    $region15: #{tpu_custom_call.1} parent=1 // pred_check_branch
      %38 = sbr.rel (0) target = $region17
    $region16: #{tpu_custom_call.1} parent=1 // pred_region
      %39 = dma.done [#allocation6], 128
    $region17: #{tpu_custom_call.1} parent=1 // pred_fallthru
      _
    %v40 = vld [vmem:[#allocation2] sm:$0xf]
    %v41 = vld [vmem:[#allocation2 + $0x4] sm:$0xf]
    %v42 = vld [vmem:[#allocation5] sm:$0xf]
    %s43 = scalar_lea.vmem [#allocation5], 4
    %v44 = vld [vmem:[%s43] sm:$0xf]
    %v45 = vlaneseq
    %v46 = vand.u32 %v45, 127
    %vm47 = vcmp.lt.s32.totalorder %v46, 0
    %v48 = vsub.s32 0, %v46
    %v49 = vsel %vm47, %v48, %v46
    %v50 = vshrl.u32 %v49, 1
    %v51 = vand.u32 %v49, 1
    %v52 = vsub.s32 0, %v51
    %v53 = vsel %vm47, %v52, %v51
    %vm54 = vcmp.ne.s32.totalorder %v53, 0
    %vm55 = vcmp.lt.s32.totalorder %v53, 0
    %vm56 = vmand %vm55, %vm54
    %v57 = vadd.s32 %v53, 2
    %v58 = vsel %vm56, %v57, %v53
    %vm59 = vcmp.eq.s32.totalorder %v58, 0
    %60 = vrot.lane.b32.xlu0 %v40, 1
    %v61 = vpop.permute.xlu0 %60
    %62 = vrot.lane.b32.xlu0 %v41, 1
    %v63 = vpop.permute.xlu0 %62
    %64 = vrot.lane.b32.xlu0 %v40, 127
    %v65 = vpop.permute.xlu0 %64
    %66 = vrot.lane.b32.xlu0 %v41, 127
    %v67 = vpop.permute.xlu0 %66
    %v68 = vsel %vm59, 1, 0
    %vm69 = vcmp.eq.s32.totalorder %v68, 1
    %v70 = vsel %vm69, %v65, %v61
    %v71 = vsel %vm69, %v67, %v63
    %v72 = vmul.f32 %v40, %v42
    %v73 = vmul.f32 %v41, %v42
    %v74 = vmul.f32 %v70, %v44
    %v75 = vmul.f32 %v71, %v44
    %v76 = vadd.f32 %v72, %v74
    %v77 = vadd.f32 %v73, %v75
    %78 = vst [vmem:[#allocation7] sm:$0xf] %v76
    %79 = vst [vmem:[#allocation7 + $0x4] sm:$0xf] %v77
    // Predicated region
    $region18: #{tpu_custom_call.1} parent=1 // pred_check
      _
    $region19: #{tpu_custom_call.1} parent=1 // pred_check_branch
      %81 = sbr.rel (0) target = $region21
    $region20: #{tpu_custom_call.1} parent=1 // pred_region
      %s83 = ssub.s32 128, 128
      %84 = vsyncadd [#allocation4], %s83
      %s85 = sshll.u32 [#allocation7], 4
      %s86 = int_to_ptr.vmem [resolvable:$true] %s85
      %91 = dma.vmem_to_hbm [thread:$0]  %s86, 128, %s2, [#allocation4], 64, 64, 4
    $region21: #{tpu_custom_call.1} parent=1 // pred_fallthru
      _
    // Predicated region
    $region22: #{tpu_custom_call.1} parent=1 // pred_check
      _
    $region23: #{tpu_custom_call.1} parent=1 // pred_check_branch
      %93 = sbr.rel (0) target = $region25
    $region24: #{tpu_custom_call.1} parent=1 // pred_region
      %94 = dma.done [#allocation4], 128
    $region25: #{tpu_custom_call.1} parent=1 // pred_fallthru
      _
    %95 = vsyncpa [#allocation3], 1
    %96 = vsyncpa [#allocation6], 1
    %97 = vsyncpa [#allocation4], 1

</llo_original>
